<compile_context>
chip_gen: v5e
topology: v5e:2x2
jax: 0.10.0
libtpu: 0.0.40
codegen_flags: <defaults>
</compile_context>

<pallas_src>
import numpy as np
import jax
import jax.numpy as jnp
from jax.experimental import pallas as pl
from jax.experimental.pallas import tpu as pltpu


# ----------------------------------------------------------------------------
# Pallas kernel: lane-dense per-pixel "inside any box" mask for the full batch
# ----------------------------------------------------------------------------
def _make_mask_kernel(B, N, HW):
    def kernel(bounds_ref, row_ref, col_ref, mask_ref):
        # bounds_ref: SMEM (B*N*4,) int32 -- per box [x0, y0, x1, y1] integer
        #             pixel bounds (lower bounds trunc'ed, upper floor'ed).
        # row_ref   : VMEM (1, HW) int32  -- flat pixel p -> row  i = p // W
        # col_ref   : VMEM (1, HW) int32  -- flat pixel p -> col  j = p %  W
        # mask_ref  : VMEM (B, HW) int8   -- 1 where the pixel is in any box
        ii = row_ref[...]
        jj = col_ref[...]
        rows = []
        # B and N are small and static -> fully unrolled.
        # TODO(synk): for large N switch to lax.fori_loop(..., unroll=4) over
        # the SMEM table to bound vreg pressure / code size.
        for b in range(B):
            acc = jnp.zeros((1, HW), dtype=jnp.bool_)
            for n in range(N):
                base = (b * N + n) * 4
                x0 = bounds_ref[base + 0]
                y0 = bounds_ref[base + 1]
                x1 = bounds_ref[base + 2]
                y1 = bounds_ref[base + 3]
                acc = acc | ((ii >= y0) & (ii <= y1) & (jj >= x0) & (jj <= x1))
            rows.append(acc.astype(jnp.int32))
        mask = rows[0] if B == 1 else jnp.concatenate(rows, axis=0)
        mask_ref[...] = mask.astype(jnp.int8)   # single lane-dense full store

    return kernel


def compute_box_masks(bounds, row_map, col_map, B, N, HW):
    """bounds: (B*N*4,) int32; row/col maps: (1, HW) int32 -> (B, HW) int8."""
    return pl.pallas_call(
        _make_mask_kernel(B, N, HW),
        out_shape=jax.ShapeDtypeStruct((B, HW), jnp.int8),
        in_specs=[
            pl.BlockSpec(memory_space=pltpu.MemorySpace.SMEM),   # box bounds
            pl.BlockSpec(memory_space=pltpu.MemorySpace.VMEM),   # row map
            pl.BlockSpec(memory_space=pltpu.MemorySpace.VMEM),   # col map
        ],
        out_specs=pl.BlockSpec(memory_space=pltpu.MemorySpace.VMEM),
    )(bounds, row_map, col_map)


# ----------------------------------------------------------------------------
# On-device mask + padded compaction + feature gather (single jit dispatch)
# ----------------------------------------------------------------------------
@jax.jit
def _select_on_device(f1, f2, boxes):
    B, C, H, W = f1.shape
    HW = H * W
    N = boxes.shape[1]

    # rescale_bboxes: cxcywh -> xyxy, scaled by (img_w, img_h) = (W, H).
    bx = boxes.astype(jnp.float32)
    cx, cy, bw, bh = bx[..., 0], bx[..., 1], bx[..., 2], bx[..., 3]
    x0 = (cx - 0.5 * bw) * W
    y0 = (cy - 0.5 * bh) * H
    x1 = (cx + 0.5 * bw) * W
    y1 = (cy + 0.5 * bh) * H
    # Integer pixel bounds: lower = trunc (matches np.trunc in the reference),
    # upper = floor so that for integer j:  j <= x1 (float) <=> j <= floor(x1).
    bounds = jnp.stack(
        [jnp.trunc(x0), jnp.trunc(y0), jnp.floor(x1), jnp.floor(y1)],
        axis=-1).astype(jnp.int32).reshape(B * N * 4)

    flat = jnp.arange(HW, dtype=jnp.int32)
    row_map = (flat // W).reshape(1, HW)
    col_map = (flat % W).reshape(1, HW)

    mask = compute_box_masks(bounds, row_map, col_map, B, N, HW) != 0  # (B,HW)
    counts = jnp.sum(mask.astype(jnp.int32), axis=1)                   # (B,)

    # Padded compaction: selected flat indices first, in ascending (i*W + j)
    # order -- identical ordering to i_index[mask] / j_index[mask].
    key = jnp.where(mask, flat[None, :], HW + flat[None, :])
    sel_idx = jnp.argsort(key, axis=1).astype(jnp.int32)               # (B,HW)

    gather = jnp.broadcast_to(sel_idx[:, None, :], (B, C, HW))
    sel1 = jnp.take_along_axis(f1.reshape(B, C, HW), gather, axis=2)
    sel2 = jnp.take_along_axis(f2.reshape(B, C, HW), gather, axis=2)
    return counts, sel_idx, sel1, sel2


# ----------------------------------------------------------------------------
# FeatureLoss.forward equivalent
# ----------------------------------------------------------------------------
def feature_loss_forward(feat, contrast, labels):
    """feat/contrast: lists of (f, m) with f in NCHW; labels: list of dicts
    with 'boxes' of shape [N, 4] (cxcywh, normalized; same N per image)."""
    f1, _m1 = feat[-1]
    f2, _m2 = contrast[-1]
    B, _C, _H, W = f1.shape
    boxes = jnp.stack([jnp.asarray(lab["boxes"]) for lab in labels], axis=0)
    if boxes.shape[1] == 0:
        # Reference would crash on zero boxes; we refuse explicitly instead.
        raise ValueError("each image needs at least one box")

    counts, sel_idx, sel1, sel2 = _select_on_device(f1, f2, boxes)

    # TODO(synk): ragged (data-dependent) per-image output shapes force the
    # per-image counts onto the host; that is the only D2H transfer (B int32).
    counts_host = np.asarray(counts)

    feat_loc, selected_feat = [], []
    for b in range(B):
        c = int(counts_host[b])
        idx_b = sel_idx[b, :c]                       # device slice, shape (c,)
        feat_loc.append((idx_b // W, idx_b % W))
        selected_feat.append((sel1[b, :, :c], sel2[b, :, :c]))
    return feat_loc, selected_feat


# ----------------------------------------------------------------------------
# Pure-numpy reference (mirrors the PyTorch module exactly)
# ----------------------------------------------------------------------------
def _ref_forward(f1, f2, boxes, H, W):
    B = f1.shape[0]
    i_index = np.repeat(np.arange(H), W)
    j_index = np.tile(np.arange(W), H)
    feat_loc, selected = [], []
    for b in range(B):
        bx = np.asarray(boxes[b], dtype=np.float32)
        xyxy = np.stack(
            [bx[:, 0] - 0.5 * bx[:, 2], bx[:, 1] - 0.5 * bx[:, 3],
             bx[:, 0] + 0.5 * bx[:, 2], bx[:, 1] + 0.5 * bx[:, 3]], axis=1)
        xyxy = xyxy * np.array([W, H, W, H], dtype=np.float32)
        masks = [(np.trunc(xyxy[i, 1]) <= i_index) & (i_index <= xyxy[i, 3]) &
                 (np.trunc(xyxy[i, 0]) <= j_index) & (j_index <= xyxy[i, 2])
                 for i in range(xyxy.shape[0])]
        m = np.any(masks, axis=0) if len(masks) > 1 else masks[0]
        feat_loc.append((i_index[m], j_index[m]))
        selected.append((f1[b][:, i_index[m], j_index[m]],
                         f2[b][:, i_index[m], j_index[m]]))
    return feat_loc, selected


if __name__ == "__main__":
    B, C, H, W, N = 2, 4, 16, 16, 3

    key = jax.random.PRNGKey(0)
    k1, k2, k3, k4 = jax.random.split(key, 4)
    f1 = jax.random.normal(k1, (B, C, H, W), dtype=jnp.float32)
    f2 = jax.random.normal(k2, (B, C, H, W), dtype=jnp.float32)
    m1 = jnp.zeros((B, H, W), dtype=bool)
    m2 = jnp.zeros((B, H, W), dtype=bool)
    centers = jax.random.uniform(k3, (B, N, 2), minval=0.25, maxval=0.75)
    sizes = jax.random.uniform(k4, (B, N, 2), minval=0.10, maxval=0.40)
    boxes = jnp.concatenate([centers, sizes], axis=-1)  # cxcywh, normalized

    feat = [(f1, m1)]
    contrast = [(f2, m2)]
    labels = [{"boxes": boxes[b]} for b in range(B)]

    feat_loc, selected_feat = feature_loss_forward(feat, contrast, labels)
    jax.block_until_ready((feat_loc, selected_feat))

    # Verify against the pure-numpy reference of the PyTorch module.
    ref_loc, ref_sel = _ref_forward(np.asarray(f1), np.asarray(f2),
                                    np.asarray(boxes), H, W)
    for b in range(B):
        np.testing.assert_array_equal(np.asarray(feat_loc[b][0]), ref_loc[b][0])
        np.testing.assert_array_equal(np.asarray(feat_loc[b][1]), ref_loc[b][1])
        np.testing.assert_allclose(np.asarray(selected_feat[b][0]), ref_sel[b][0])
        np.testing.assert_allclose(np.asarray(selected_feat[b][1]), ref_sel[b][1])

    print("KERNEL_OK")
</pallas_src>

<mosaic_0001>
module attributes {stable_mosaic.version = 11 : i64} {
  func.func @kernel(%arg0: memref<24xi32, #tpu.memory_space<smem>>, %arg1: memref<1x256xi32, #tpu.memory_space<vmem>>, %arg2: memref<1x256xi32, #tpu.memory_space<vmem>>, %arg3: memref<2x256xi8, #tpu.memory_space<vmem>>) attributes {dimension_semantics = [], scalar_prefetch = 0 : i64, scratch_operands = 0 : i64, tpu.core_type = #tpu.core_type<tc>} {
    %c0 = arith.constant 0 : index
    %c0_0 = arith.constant 0 : index
    %0 = vector.load %arg1[%c0, %c0_0] : memref<1x256xi32, #tpu.memory_space<vmem>>, vector<1x256xi32>
    %c0_1 = arith.constant 0 : index
    %c0_2 = arith.constant 0 : index
    %1 = vector.load %arg2[%c0_1, %c0_2] : memref<1x256xi32, #tpu.memory_space<vmem>>, vector<1x256xi32>
    %false = arith.constant false
    %2 = vector.broadcast %false : i1 to vector<1x256xi1>
    %c0_3 = arith.constant 0 : index
    %3 = memref.load %arg0[%c0_3] : memref<24xi32, #tpu.memory_space<smem>>
    %c1 = arith.constant 1 : index
    %4 = memref.load %arg0[%c1] : memref<24xi32, #tpu.memory_space<smem>>
    %c2 = arith.constant 2 : index
    %5 = memref.load %arg0[%c2] : memref<24xi32, #tpu.memory_space<smem>>
    %c3 = arith.constant 3 : index
    %6 = memref.load %arg0[%c3] : memref<24xi32, #tpu.memory_space<smem>>
    %7 = vector.broadcast %4 : i32 to vector<1x256xi32>
    %8 = arith.cmpi sge, %0, %7 : vector<1x256xi32>
    %9 = vector.broadcast %6 : i32 to vector<1x256xi32>
    %10 = arith.cmpi sle, %0, %9 : vector<1x256xi32>
    %11 = arith.andi %8, %10 : vector<1x256xi1>
    %12 = vector.broadcast %3 : i32 to vector<1x256xi32>
    %13 = arith.cmpi sge, %1, %12 : vector<1x256xi32>
    %14 = arith.andi %11, %13 : vector<1x256xi1>
    %15 = vector.broadcast %5 : i32 to vector<1x256xi32>
    %16 = arith.cmpi sle, %1, %15 : vector<1x256xi32>
    %17 = arith.andi %14, %16 : vector<1x256xi1>
    %18 = arith.ori %2, %17 : vector<1x256xi1>
    %c4 = arith.constant 4 : index
    %19 = memref.load %arg0[%c4] : memref<24xi32, #tpu.memory_space<smem>>
    %c5 = arith.constant 5 : index
    %20 = memref.load %arg0[%c5] : memref<24xi32, #tpu.memory_space<smem>>
    %c6 = arith.constant 6 : index
    %21 = memref.load %arg0[%c6] : memref<24xi32, #tpu.memory_space<smem>>
    %c7 = arith.constant 7 : index
    %22 = memref.load %arg0[%c7] : memref<24xi32, #tpu.memory_space<smem>>
    %23 = vector.broadcast %20 : i32 to vector<1x256xi32>
    %24 = arith.cmpi sge, %0, %23 : vector<1x256xi32>
    %25 = vector.broadcast %22 : i32 to vector<1x256xi32>
    %26 = arith.cmpi sle, %0, %25 : vector<1x256xi32>
    %27 = arith.andi %24, %26 : vector<1x256xi1>
    %28 = vector.broadcast %19 : i32 to vector<1x256xi32>
    %29 = arith.cmpi sge, %1, %28 : vector<1x256xi32>
    %30 = arith.andi %27, %29 : vector<1x256xi1>
    %31 = vector.broadcast %21 : i32 to vector<1x256xi32>
    %32 = arith.cmpi sle, %1, %31 : vector<1x256xi32>
    %33 = arith.andi %30, %32 : vector<1x256xi1>
    %34 = arith.ori %18, %33 : vector<1x256xi1>
    %c8 = arith.constant 8 : index
    %35 = memref.load %arg0[%c8] : memref<24xi32, #tpu.memory_space<smem>>
    %c9 = arith.constant 9 : index
    %36 = memref.load %arg0[%c9] : memref<24xi32, #tpu.memory_space<smem>>
    %c10 = arith.constant 10 : index
    %37 = memref.load %arg0[%c10] : memref<24xi32, #tpu.memory_space<smem>>
    %c11 = arith.constant 11 : index
    %38 = memref.load %arg0[%c11] : memref<24xi32, #tpu.memory_space<smem>>
    %39 = vector.broadcast %36 : i32 to vector<1x256xi32>
    %40 = arith.cmpi sge, %0, %39 : vector<1x256xi32>
    %41 = vector.broadcast %38 : i32 to vector<1x256xi32>
    %42 = arith.cmpi sle, %0, %41 : vector<1x256xi32>
    %43 = arith.andi %40, %42 : vector<1x256xi1>
    %44 = vector.broadcast %35 : i32 to vector<1x256xi32>
    %45 = arith.cmpi sge, %1, %44 : vector<1x256xi32>
    %46 = arith.andi %43, %45 : vector<1x256xi1>
    %47 = vector.broadcast %37 : i32 to vector<1x256xi32>
    %48 = arith.cmpi sle, %1, %47 : vector<1x256xi32>
    %49 = arith.andi %46, %48 : vector<1x256xi1>
    %50 = arith.ori %34, %49 : vector<1x256xi1>
    %51 = arith.extui %50 : vector<1x256xi1> to vector<1x256xi32>
    %false_4 = arith.constant false
    %52 = vector.broadcast %false_4 : i1 to vector<1x256xi1>
    %c12 = arith.constant 12 : index
    %53 = memref.load %arg0[%c12] : memref<24xi32, #tpu.memory_space<smem>>
    %c13 = arith.constant 13 : index
    %54 = memref.load %arg0[%c13] : memref<24xi32, #tpu.memory_space<smem>>
    %c14 = arith.constant 14 : index
    %55 = memref.load %arg0[%c14] : memref<24xi32, #tpu.memory_space<smem>>
    %c15 = arith.constant 15 : index
    %56 = memref.load %arg0[%c15] : memref<24xi32, #tpu.memory_space<smem>>
    %57 = vector.broadcast %54 : i32 to vector<1x256xi32>
    %58 = arith.cmpi sge, %0, %57 : vector<1x256xi32>
    %59 = vector.broadcast %56 : i32 to vector<1x256xi32>
    %60 = arith.cmpi sle, %0, %59 : vector<1x256xi32>
    %61 = arith.andi %58, %60 : vector<1x256xi1>
    %62 = vector.broadcast %53 : i32 to vector<1x256xi32>
    %63 = arith.cmpi sge, %1, %62 : vector<1x256xi32>
    %64 = arith.andi %61, %63 : vector<1x256xi1>
    %65 = vector.broadcast %55 : i32 to vector<1x256xi32>
    %66 = arith.cmpi sle, %1, %65 : vector<1x256xi32>
    %67 = arith.andi %64, %66 : vector<1x256xi1>
    %68 = arith.ori %52, %67 : vector<1x256xi1>
    %c16 = arith.constant 16 : index
    %69 = memref.load %arg0[%c16] : memref<24xi32, #tpu.memory_space<smem>>
    %c17 = arith.constant 17 : index
    %70 = memref.load %arg0[%c17] : memref<24xi32, #tpu.memory_space<smem>>
    %c18 = arith.constant 18 : index
    %71 = memref.load %arg0[%c18] : memref<24xi32, #tpu.memory_space<smem>>
    %c19 = arith.constant 19 : index
    %72 = memref.load %arg0[%c19] : memref<24xi32, #tpu.memory_space<smem>>
    %73 = vector.broadcast %70 : i32 to vector<1x256xi32>
    %74 = arith.cmpi sge, %0, %73 : vector<1x256xi32>
    %75 = vector.broadcast %72 : i32 to vector<1x256xi32>
    %76 = arith.cmpi sle, %0, %75 : vector<1x256xi32>
    %77 = arith.andi %74, %76 : vector<1x256xi1>
    %78 = vector.broadcast %69 : i32 to vector<1x256xi32>
    %79 = arith.cmpi sge, %1, %78 : vector<1x256xi32>
    %80 = arith.andi %77, %79 : vector<1x256xi1>
    %81 = vector.broadcast %71 : i32 to vector<1x256xi32>
    %82 = arith.cmpi sle, %1, %81 : vector<1x256xi32>
    %83 = arith.andi %80, %82 : vector<1x256xi1>
    %84 = arith.ori %68, %83 : vector<1x256xi1>
    %c20 = arith.constant 20 : index
    %85 = memref.load %arg0[%c20] : memref<24xi32, #tpu.memory_space<smem>>
    %c21 = arith.constant 21 : index
    %86 = memref.load %arg0[%c21] : memref<24xi32, #tpu.memory_space<smem>>
    %c22 = arith.constant 22 : index
    %87 = memref.load %arg0[%c22] : memref<24xi32, #tpu.memory_space<smem>>
    %c23 = arith.constant 23 : index
    %88 = memref.load %arg0[%c23] : memref<24xi32, #tpu.memory_space<smem>>
    %89 = vector.broadcast %86 : i32 to vector<1x256xi32>
    %90 = arith.cmpi sge, %0, %89 : vector<1x256xi32>
    %91 = vector.broadcast %88 : i32 to vector<1x256xi32>
    %92 = arith.cmpi sle, %0, %91 : vector<1x256xi32>
    %93 = arith.andi %90, %92 : vector<1x256xi1>
    %94 = vector.broadcast %85 : i32 to vector<1x256xi32>
    %95 = arith.cmpi sge, %1, %94 : vector<1x256xi32>
    %96 = arith.andi %93, %95 : vector<1x256xi1>
    %97 = vector.broadcast %87 : i32 to vector<1x256xi32>
    %98 = arith.cmpi sle, %1, %97 : vector<1x256xi32>
    %99 = arith.andi %96, %98 : vector<1x256xi1>
    %100 = arith.ori %84, %99 : vector<1x256xi1>
    %101 = arith.extui %100 : vector<1x256xi1> to vector<1x256xi32>
    %102 = tpu.concatenate %51, %101 in 0 : vector<1x256xi32>, vector<1x256xi32> -> vector<2x256xi32>
    %103 = arith.trunci %102 : vector<2x256xi32> to vector<2x256xi8>
    %c0_5 = arith.constant 0 : index
    %c0_6 = arith.constant 0 : index
    %104 = vector.load %arg3[%c0_5, %c0_6] : memref<2x256xi8, #tpu.memory_space<vmem>>, vector<2x256xi8>
    tpu.vector_store %arg3[%c0_5, %c0_6], %103 {strides = array<i32>} : memref<2x256xi8, #tpu.memory_space<vmem>>, vector<2x256xi8>,
    return
  }
}

</mosaic_0001>

<llo_original>
// kernel: _select_on_device.1
$region0: #{_select_on_device.1}
  #allocation0 [shape = 'u32[]', space=smem, size = 0x4, offset = 0x4, fixed_abs, tag = 'smem constant byte address 0x4 - core index']
  #allocation1 [shape = 'u32[72,128]{1,0:T(1,128)}', space=vmem, size = 0x9000, scoped, tag = 'internal scratch']
  %s0 = inlined_call_operand.vmem [shape: s32[24], index: 0, kind: input, shape index: {}]
  %s1 = inlined_call_operand.vmem [shape: s32[1,256], index: 1, kind: input, shape index: {}]
  %s2 = inlined_call_operand.vmem [shape: s32[1,256], index: 2, kind: input, shape index: {}]
  %s3 = inlined_call_operand.vmem [shape: s8[2,256], index: 3, kind: output, shape index: {}]
  %s4 = sld [smem:[#allocation0]]
  $region26: #{_select_on_device.1} parent=0
    _
  %s6 = ssub.s32 1, %s4
  %s7 = scalar_select 0, %s6, %s4
  $region1: #{_select_on_device.1} parent=0
    #allocation2 [shape = 'u8[512]{0}', space=smem, size = 0x200, scoped, tag = 'input window, operand 0, single buffered']
    #allocation3 [shape = 's32[1]{0}', space=sflag, size = 0x4, scoped, tag = 'scoped memory for _select_on_device.1']
    %8 = vsyncpa [#allocation3], 0
    // Predicated region
    $region2: #{_select_on_device.1} parent=1 // pred_check
      _
    $region3: #{_select_on_device.1} parent=1 // pred_check_branch
      %10 = sbr.rel (0) target = $region5
    $region4: #{_select_on_device.1} parent=1 // pred_region
      %12 = vsyncadd [#allocation3], 0
      %s14 = sshll.u32 %s0, 4
      %s15 = int_to_ptr.vmem [resolvable:$true] %s14
      %17 = dma.vmem_to_smem %s15, 16, [#allocation2], [#allocation3]
    $region5: #{_select_on_device.1} parent=1 // pred_fallthru
      _
    // Predicated region
    $region6: #{_select_on_device.1} parent=1 // pred_check
      _
    $region7: #{_select_on_device.1} parent=1 // pred_check_branch
      %19 = sbr.rel (0) target = $region9
    $region8: #{_select_on_device.1} parent=1 // pred_region
      _
    $region9: #{_select_on_device.1} parent=1 // pred_fallthru
      _
    // Predicated region
    $region10: #{_select_on_device.1} parent=1 // pred_check
      _
    $region11: #{_select_on_device.1} parent=1 // pred_check_branch
      %21 = sbr.rel (0) target = $region13
    $region12: #{_select_on_device.1} parent=1 // pred_region
      _
    $region13: #{_select_on_device.1} parent=1 // pred_fallthru
      _
    // Predicated region
    $region14: #{_select_on_device.1} parent=1 // pred_check
      _
    $region15: #{_select_on_device.1} parent=1 // pred_check_branch
      %23 = sbr.rel (0) target = $region17
    $region16: #{_select_on_device.1} parent=1 // pred_region
      %25 = dma.done [#allocation3], 16
    $region17: #{_select_on_device.1} parent=1 // pred_fallthru
      _
    %26 = sfence
    %v27 = vld [vmem:[%s1] sm:$0x3]
    %v28 = vld [vmem:[%s2] sm:$0x3]
    %s29 = sld [smem:[#allocation2]]
    %s30 = sld [smem:[#allocation2 + $0x1]]
    %s31 = sld [smem:[#allocation2 + $0x2]]
    %s32 = sld [smem:[#allocation2 + $0x3]]
    %v33 = vstv %s30
    %vm34 = vcmp.ge.s32.totalorder %v27, %v33
    %v35 = vstv %s32
    %vm36 = vcmp.le.s32.totalorder %v27, %v35
    %vm37 = vmand %vm34, %vm36
    %v38 = vstv %s29
    %vm39 = vcmp.ge.s32.totalorder %v28, %v38
    %vm40 = vmand %vm37, %vm39
    %v41 = vstv %s31
    %vm42 = vcmp.le.s32.totalorder %v28, %v41
    %vm43 = vmand %vm40, %vm42
    %s44 = sld [smem:[#allocation2 + $0x4]]
    %s45 = sld [smem:[#allocation2 + $0x5]]
    %s46 = sld [smem:[#allocation2 + $0x6]]
    %s47 = sld [smem:[#allocation2 + $0x7]]
    %v48 = vstv %s45
    %vm49 = vcmp.ge.s32.totalorder %v27, %v48
    %v50 = vstv %s47
    %vm51 = vcmp.le.s32.totalorder %v27, %v50
    %vm52 = vmand %vm49, %vm51
    %v53 = vstv %s44
    %vm54 = vcmp.ge.s32.totalorder %v28, %v53
    %vm55 = vmand %vm52, %vm54
    %v56 = vstv %s46
    %vm57 = vcmp.le.s32.totalorder %v28, %v56
    %vm58 = vmand %vm55, %vm57
    %vm59 = vmor %vm43, %vm58
    %s60 = sld [smem:[#allocation2 + $0x8]]
    %s61 = sld [smem:[#allocation2 + $0x9]]
    %s62 = sld [smem:[#allocation2 + $0xa]]
    %s63 = sld [smem:[#allocation2 + $0xb]]
    %v64 = vstv %s61
    %vm65 = vcmp.ge.s32.totalorder %v27, %v64
    %v66 = vstv %s63
    %vm67 = vcmp.le.s32.totalorder %v27, %v66
    %vm68 = vmand %vm65, %vm67
    %v69 = vstv %s60
    %vm70 = vcmp.ge.s32.totalorder %v28, %v69
    %vm71 = vmand %vm68, %vm70
    %v72 = vstv %s62
    %vm73 = vcmp.le.s32.totalorder %v28, %v72
    %vm74 = vmand %vm71, %vm73
    %vm75 = vmor %vm59, %vm74
    %v76 = vsel %vm75, 1, 0
    %s77 = sld [smem:[#allocation2 + $0xc]]
    %s78 = sld [smem:[#allocation2 + $0xd]]
    %s79 = sld [smem:[#allocation2 + $0xe]]
    %s80 = sld [smem:[#allocation2 + $0xf]]
    %v81 = vstv %s78
    %vm82 = vcmp.ge.s32.totalorder %v27, %v81
    %v83 = vstv %s80
    %vm84 = vcmp.le.s32.totalorder %v27, %v83
    %vm85 = vmand %vm82, %vm84
    %v86 = vstv %s77
    %vm87 = vcmp.ge.s32.totalorder %v28, %v86
    %vm88 = vmand %vm85, %vm87
    %v89 = vstv %s79
    %vm90 = vcmp.le.s32.totalorder %v28, %v89
    %vm91 = vmand %vm88, %vm90
    %s92 = sld [smem:[#allocation2 + $0x10]]
    %s93 = sld [smem:[#allocation2 + $0x11]]
    %s94 = sld [smem:[#allocation2 + $0x12]]
    %s95 = sld [smem:[#allocation2 + $0x13]]
    %v96 = vstv %s93
    %vm97 = vcmp.ge.s32.totalorder %v27, %v96
    %v98 = vstv %s95
    %vm99 = vcmp.le.s32.totalorder %v27, %v98
    %vm100 = vmand %vm97, %vm99
    %v101 = vstv %s92
    %vm102 = vcmp.ge.s32.totalorder %v28, %v101
    %vm103 = vmand %vm100, %vm102
    %v104 = vstv %s94
    %vm105 = vcmp.le.s32.totalorder %v28, %v104
    %vm106 = vmand %vm103, %vm105
    %vm107 = vmor %vm91, %vm106
    %s108 = sld [smem:[#allocation2 + $0x14]]
    %s109 = sld [smem:[#allocation2 + $0x15]]
    %s110 = sld [smem:[#allocation2 + $0x16]]
    %s111 = sld [smem:[#allocation2 + $0x17]]
    %v112 = vstv %s109
    %vm113 = vcmp.ge.s32.totalorder %v27, %v112
    %v114 = vstv %s111
    %vm115 = vcmp.le.s32.totalorder %v27, %v114
    %vm116 = vmand %vm113, %vm115
    %v117 = vstv %s108
    %vm118 = vcmp.ge.s32.totalorder %v28, %v117
    %vm119 = vmand %vm116, %vm118
    %v120 = vstv %s110
    %vm121 = vcmp.le.s32.totalorder %v28, %v120
    %vm122 = vmand %vm119, %vm121
    %vm123 = vmor %vm107, %vm122
    %v124 = vsel %vm123, 1, 0
    %v125 = vperm.slane %v76, 0
    %v126 = vperm.slane %v76, 1
    %v127 = vperm.slane %v124, 0
    %v128 = vperm.slane %v124, 1
    %vm129 = vcmask 1040384
    %v130 = vsel %vm129, %v125, %v127
    %v131 = vsel %vm129, %v126, %v128
    %v132 = vpack.c.b16 %v130, %v130
    %v133 = vpack.c.b8 %v132, %v132
    %v134 = vpack.c.b16 %v131, %v131
    %v135 = vpack.c.b8 %v134, %v134
    %v136 = vrot.slane %v135, 7
    %v139 = vsel %vm129, %v133, %v136
    %vm141 = vcmask 1040384
    %vm142 = vsmask.f32 256
    %vm143 = vmand %vm141, %vm142
    %vm144 = vcmask 1041409
    %vm145 = vsmask.f32 1280
    %vm146 = vmand %vm144, %vm145
    %vm147 = vmor %vm146, %vm143
    %v148 = vld [vmem:[%s3] sm:$0x3]
    %v149 = vsel %vm147, %v139, %v148
    %150 = vst [vmem:[%s3] sm:$0x3] %v149
    // Predicated region
    $region18: #{_select_on_device.1} parent=1 // pred_check
      _
    $region19: #{_select_on_device.1} parent=1 // pred_check_branch
      %152 = sbr.rel (0) target = $region21
    $region20: #{_select_on_device.1} parent=1 // pred_region
      _
    $region21: #{_select_on_device.1} parent=1 // pred_fallthru
      _
    // Predicated region
    $region22: #{_select_on_device.1} parent=1 // pred_check
      _
    $region23: #{_select_on_device.1} parent=1 // pred_check_branch
      %154 = sbr.rel (0) target = $region25
    $region24: #{_select_on_device.1} parent=1 // pred_region
      _
    $region25: #{_select_on_device.1} parent=1 // pred_fallthru
      _
    %155 = vsyncpa [#allocation3], 1

</llo_original>
